<compile_context>
chip_gen: v7x
topology: tpu7x:2x2x1
jax: 0.10.0
libtpu: 0.0.40
codegen_flags: <defaults>
</compile_context>

<pallas_src>
import jax
import jax.numpy as jnp
from jax import lax
from jax.experimental import pallas as pl
from jax.experimental.pallas import tpu as pltpu

BN_EPS = 1e-5


def _round_up(x, m):
    return (x + m - 1) // m * m


def _ann3d_kernel(x_ref, w1_ref, b1_ref, w2_ref, b2_ref, w3_ref, b3_ref, o_ref):
    x = x_ref[...]
    if x.dtype != w1_ref.dtype:           # only casts when compute_dtype != f32
        x = x.astype(w1_ref.dtype)
    # fc1 + ReLU   (BN1 folded into w2/b2, BN2 into w3/b3, dropout == identity)
    h1 = jnp.dot(x, w1_ref[...], preferred_element_type=jnp.float32)
    h1 = jnp.maximum(h1 + b1_ref[...], 0.0)
    # fc2 (+ folded BN1) + ReLU
    h2 = jnp.dot(h1.astype(w2_ref.dtype), w2_ref[...],
                 preferred_element_type=jnp.float32)
    h2 = jnp.maximum(h2 + b2_ref[...], 0.0)
    # fc3 (+ folded BN2); W3 columns padded to 128 for the MXU, but only the
    # real output columns are stored back (narrow writeback, 64x fewer bytes).
    h3 = jnp.dot(h2.astype(w3_ref.dtype), w3_ref[...],
                 preferred_element_type=jnp.float32) + b3_ref[...]
    o_ref[...] = h3[:, :o_ref.shape[1]].astype(o_ref.dtype)


def fold_params(params, input_dim, num_steps, *, compute_dtype=jnp.float32):
    """Pre-compute kernel parameters:
      * fold the (0,2,1) input permute into W1's rows,
      * fold eval-mode BN1 into fc2 and BN2 into fc3,
      * zero-pad fc3's columns to 128 for the MXU (kernel stores only the real ones).
    Weights may be cast to compute_dtype; biases stay f32 (added to f32 acc)."""
    (w1, b1, g1, be1, m1, v1,
     w2, b2, g2, be2, m2, v2,
     w3, b3) = params
    d_in = input_dim * num_steps
    l1, l2, d_out = w1.shape[1], w2.shape[1], w3.shape[1]

    # (1) permute fold: PyTorch flattens as (t, c) -> index t*C + c; the kernel
    # feeds x.reshape(B, C*T) whose flat index is c*T + t, so permute W1's rows.
    w1p = jnp.transpose(
        w1.reshape(num_steps, input_dim, l1), (1, 0, 2)).reshape(d_in, l1)

    # (2) BN folds (eval mode, running stats): BN(h) = s*h + t.
    s1 = g1 * lax.rsqrt(v1 + BN_EPS)            # (1, l1)
    t1 = be1 - m1 * s1
    w2p = w2 * s1.reshape(l1, 1)                # scale rows of W2
    b2p = b2 + t1 @ w2

    s2 = g2 * lax.rsqrt(v2 + BN_EPS)
    t2 = be2 - m2 * s2
    w3p = w3 * s2.reshape(l2, 1)
    b3p = b3 + t2 @ w3

    # (3) pad fc3 columns to 128 for a clean MXU shape (not written back to HBM).
    d_out_pad = max(128, _round_up(d_out, 128))
    w3p = jnp.pad(w3p, ((0, 0), (0, d_out_pad - d_out)))
    b3p = jnp.pad(b3p, ((0, 0), (0, d_out_pad - d_out)))

    w1p = w1p.astype(compute_dtype)
    w2p = w2p.astype(compute_dtype)
    w3p = w3p.astype(compute_dtype)
    return (w1p, b1, w2p, b2p, w3p, b3p)


def ann_model_3d_forward(x, folded_params, output_dim, *, block_b=4096):
    """x: (B, input_dim, num_steps) float32.  Returns (B, output_dim) float32."""
    w1, b1, w2, b2, w3, b3 = folded_params
    B, C, T = x.shape
    d_in = C * T
    assert w1.shape[0] == d_in, (w1.shape, d_in)
    d_out = output_dim
    assert d_out <= w3.shape[1]

    # Permute already folded into W1's rows -> plain reshape, no runtime
    # transpose, and NO wrapper-side dtype cast (extra HBM pass).
    x_flat = x.reshape(B, d_in)

    # Batch tiling: tb a multiple of 8 sublanes; weights stay resident across
    # tiles.  Clamp so there are >= 2 tiles when B allows, letting the
    # "parallel" grid axis feed both v7x TensorCores.
    tb = min(_round_up(block_b, 8), _round_up(B, 8))
    if B > 8:
        tb = min(tb, _round_up(pl.cdiv(B, 2), 8))
    b_pad = _round_up(B, tb)
    if b_pad != B:
        x_flat = jnp.pad(x_flat, ((0, b_pad - B), (0, 0)))
    nb = b_pad // tb

    wbytes = sum(int(a.size) * a.dtype.itemsize for a in (w1, b1, w2, b2, w3, b3))
    cost = pl.CostEstimate(
        flops=int(2 * b_pad * (d_in * w1.shape[1]
                               + w2.shape[0] * w2.shape[1]
                               + w3.shape[0] * w3.shape[1])),
        transcendentals=0,
        bytes_accessed=int(b_pad * (d_in * x_flat.dtype.itemsize + d_out * 4)
                           + wbytes),
    )

    grid_spec = pltpu.PrefetchScalarGridSpec(
        num_scalar_prefetch=0,
        grid=(nb,),
        in_specs=[
            pl.BlockSpec((tb, d_in), lambda i: (i, 0)),   # activation tile
            pl.BlockSpec(w1.shape, lambda i: (0, 0)),     # resident weights/biases
            pl.BlockSpec(b1.shape, lambda i: (0, 0)),
            pl.BlockSpec(w2.shape, lambda i: (0, 0)),
            pl.BlockSpec(b2.shape, lambda i: (0, 0)),
            pl.BlockSpec(w3.shape, lambda i: (0, 0)),
            pl.BlockSpec(b3.shape, lambda i: (0, 0)),
        ],
        # Narrow output: only the real columns go back to HBM.
        out_specs=pl.BlockSpec((tb, d_out), lambda i: (i, 0)),
    )

    out = pl.pallas_call(
        _ann3d_kernel,
        out_shape=jax.ShapeDtypeStruct((b_pad, d_out), jnp.float32),
        grid_spec=grid_spec,
        compiler_params=pltpu.CompilerParams(
            dimension_semantics=("parallel",),   # batch tiles -> both TCs on v7x
        ),
        cost_estimate=cost,
    )(x_flat, w1, b1, w2, b2, w3, b3)

    return out[:B]


def init_params(key, input_dim, num_steps, layer1=32, layer2=48, output_dim=2):
    """PyTorch-style params (weights stored transposed: (in_features, out_features)).
    BatchNorm running stats are non-trivial so the BN fold is actually exercised."""
    d_in = input_dim * num_steps
    keys = jax.random.split(key, 14)

    def linear(kw, kb, fan_in, fan_out):
        bound = 1.0 / jnp.sqrt(jnp.float32(fan_in))
        w = jax.random.uniform(kw, (fan_in, fan_out), jnp.float32, -bound, bound)
        b = jax.random.uniform(kb, (1, fan_out), jnp.float32, -bound, bound)
        return w, b

    w1, b1 = linear(keys[0], keys[1], d_in, layer1)
    w2, b2 = linear(keys[2], keys[3], layer1, layer2)
    w3, b3 = linear(keys[4], keys[5], layer2, output_dim)

    def bn(kg, kb, km, kv, n):
        g = jax.random.uniform(kg, (1, n), jnp.float32, 0.5, 1.5)
        be = 0.1 * jax.random.normal(kb, (1, n), jnp.float32)
        m = 0.1 * jax.random.normal(km, (1, n), jnp.float32)
        v = jax.random.uniform(kv, (1, n), jnp.float32, 0.5, 1.5)
        return g, be, m, v

    g1, be1, m1, v1 = bn(keys[6], keys[7], keys[8], keys[9], layer1)
    g2, be2, m2, v2 = bn(keys[10], keys[11], keys[12], keys[13], layer2)

    return (w1, b1, g1, be1, m1, v1,
            w2, b2, g2, be2, m2, v2,
            w3, b3)


def reference_forward(x, params):
    """Pure-JAX reference mirroring the PyTorch forward (eval mode, unfused BN)."""
    (w1, b1, g1, be1, m1, v1,
     w2, b2, g2, be2, m2, v2,
     w3, b3) = params
    B = x.shape[0]
    xf = jnp.transpose(x, (0, 2, 1)).reshape(B, -1)
    h = jnp.maximum(xf @ w1 + b1, 0.0)
    h = (h - m1) / jnp.sqrt(v1 + BN_EPS) * g1 + be1
    h = jnp.maximum(h @ w2 + b2, 0.0)
    h = (h - m2) / jnp.sqrt(v2 + BN_EPS) * g2 + be2
    return h @ w3 + b3


def folded_reference(x, folded_params, output_dim):
    """Plain-JAX forward using the exact folded params / op order of the kernel."""
    w1, b1, w2, b2, w3, b3 = folded_params
    B = x.shape[0]
    xf = x.reshape(B, -1).astype(w1.dtype)
    h = jnp.maximum(jnp.dot(xf, w1, preferred_element_type=jnp.float32) + b1, 0.0)
    h = jnp.maximum(
        jnp.dot(h.astype(w2.dtype), w2, preferred_element_type=jnp.float32) + b2, 0.0)
    o = jnp.dot(h.astype(w3.dtype), w3, preferred_element_type=jnp.float32) + b3
    return o[:, :output_dim]


if __name__ == "__main__":
    # Small shapes consistent with the module: input_dim=4 channels, num_steps=7.
    INPUT_DIM, NUM_STEPS = 4, 7
    LAYER1, LAYER2, OUTPUT_DIM = 32, 48, 2

    key = jax.random.PRNGKey(0)
    kx, kp, kx2 = jax.random.split(key, 3)
    raw_params = init_params(kp, INPUT_DIM, NUM_STEPS, LAYER1, LAYER2, OUTPUT_DIM)
    params = fold_params(raw_params, INPUT_DIM, NUM_STEPS)   # f32 compute

    # --- small batch (single grid tile) ---
    B = 8
    x = jax.random.normal(kx, (B, INPUT_DIM, NUM_STEPS), jnp.float32)
    out = jax.block_until_ready(ann_model_3d_forward(x, params, OUTPUT_DIM))
    assert out.shape == (B, OUTPUT_DIM), out.shape

    ref_folded = folded_reference(x, params, OUTPUT_DIM)
    assert jnp.allclose(out, ref_folded, atol=1e-4, rtol=1e-4), (
        f"folded-ref max abs err {jnp.max(jnp.abs(out - ref_folded))}")

    # Semantic check vs the unfused PyTorch-mirroring forward.  BN folding
    # reassociates floating point and the MXU uses default (reduced) matmul
    # precision, so this tolerance is looser.
    ref = reference_forward(x, raw_params)
    assert jnp.allclose(out, ref, atol=1e-2, rtol=1e-2), (
        f"torch-ref max abs err {jnp.max(jnp.abs(out - ref))}")

    # --- non-multiple batch (exercises padding + 2 grid tiles / parallel axis) ---
    B2 = 300
    x2 = jax.random.normal(kx2, (B2, INPUT_DIM, NUM_STEPS), jnp.float32)
    out2 = jax.block_until_ready(ann_model_3d_forward(x2, params, OUTPUT_DIM))
    assert out2.shape == (B2, OUTPUT_DIM), out2.shape
    ref2 = folded_reference(x2, params, OUTPUT_DIM)
    assert jnp.allclose(out2, ref2, atol=1e-4, rtol=1e-4), (
        f"folded-ref(B=300) max abs err {jnp.max(jnp.abs(out2 - ref2))}")

    print("KERNEL_OK")
</pallas_src>

<mosaic_0001>
module attributes {stable_mosaic.version = 11 : i64} {
  func.func @_ann3d_kernel(%arg0: i32, %arg1: memref<8x28xf32, #tpu.memory_space<vmem>>, %arg2: memref<28x32xf32, #tpu.memory_space<vmem>>, %arg3: memref<1x32xf32, #tpu.memory_space<vmem>>, %arg4: memref<32x48xf32, #tpu.memory_space<vmem>>, %arg5: memref<1x48xf32, #tpu.memory_space<vmem>>, %arg6: memref<48x128xf32, #tpu.memory_space<vmem>>, %arg7: memref<1x128xf32, #tpu.memory_space<vmem>>, %arg8: memref<8x2xf32, #tpu.memory_space<vmem>>) attributes {dimension_semantics = [#tpu.dimension_semantics<parallel>], iteration_bounds = array<i64: 1>, scalar_prefetch = 0 : i64, scratch_operands = 0 : i64, tpu.core_type = #tpu.core_type<tc>, window_params = [{transform_indices = @transform_0, window_bounds = array<i64: 8, 28>}, {pipeline_mode = #tpu.pipeline_mode<synchronous>, transform_indices = @transform_1, window_bounds = array<i64: 28, 32>}, {pipeline_mode = #tpu.pipeline_mode<synchronous>, transform_indices = @transform_2, window_bounds = array<i64: 1, 32>}, {pipeline_mode = #tpu.pipeline_mode<synchronous>, transform_indices = @transform_3, window_bounds = array<i64: 32, 48>}, {pipeline_mode = #tpu.pipeline_mode<synchronous>, transform_indices = @transform_4, window_bounds = array<i64: 1, 48>}, {pipeline_mode = #tpu.pipeline_mode<synchronous>, transform_indices = @transform_5, window_bounds = array<i64: 48, 128>}, {pipeline_mode = #tpu.pipeline_mode<synchronous>, transform_indices = @transform_6, window_bounds = array<i64: 1, 128>}, {transform_indices = @transform_7, window_bounds = array<i64: 8, 2>}]} {
    %c0 = arith.constant 0 : index
    %c0_0 = arith.constant 0 : index
    %0 = vector.load %arg1[%c0, %c0_0] : memref<8x28xf32, #tpu.memory_space<vmem>>, vector<8x28xf32>
    %c0_1 = arith.constant 0 : index
    %c0_2 = arith.constant 0 : index
    %1 = vector.load %arg2[%c0_1, %c0_2] : memref<28x32xf32, #tpu.memory_space<vmem>>, vector<28x32xf32>
    %cst = arith.constant dense<0.000000e+00> : vector<8x32xf32>
    %2 = tpu.matmul %0, %1, %cst {dimension_numbers = #tpu.dot_dimension_numbers<[1], [0], [0], [1], [0, 0, 1, 1], [], []>} : vector<8x28xf32>, vector<28x32xf32>, vector<8x32xf32> -> vector<8x32xf32>
    %c0_3 = arith.constant 0 : index
    %c0_4 = arith.constant 0 : index
    %3 = vector.load %arg3[%c0_3, %c0_4] : memref<1x32xf32, #tpu.memory_space<vmem>>, vector<1x32xf32>
    %4 = vector.broadcast %3 : vector<1x32xf32> to vector<8x32xf32>
    %5 = arith.addf %2, %4 : vector<8x32xf32>
    %cst_5 = arith.constant 0.000000e+00 : f32
    %6 = vector.broadcast %cst_5 : f32 to vector<8x32xf32>
    %7 = arith.maximumf %5, %6 : vector<8x32xf32>
    %c0_6 = arith.constant 0 : index
    %c0_7 = arith.constant 0 : index
    %8 = vector.load %arg4[%c0_6, %c0_7] : memref<32x48xf32, #tpu.memory_space<vmem>>, vector<32x48xf32>
    %cst_8 = arith.constant dense<0.000000e+00> : vector<8x48xf32>
    %9 = tpu.matmul %7, %8, %cst_8 {dimension_numbers = #tpu.dot_dimension_numbers<[1], [0], [0], [1], [0, 0, 1, 1], [], []>} : vector<8x32xf32>, vector<32x48xf32>, vector<8x48xf32> -> vector<8x48xf32>
    %c0_9 = arith.constant 0 : index
    %c0_10 = arith.constant 0 : index
    %10 = vector.load %arg5[%c0_9, %c0_10] : memref<1x48xf32, #tpu.memory_space<vmem>>, vector<1x48xf32>
    %11 = vector.broadcast %10 : vector<1x48xf32> to vector<8x48xf32>
    %12 = arith.addf %9, %11 : vector<8x48xf32>
    %cst_11 = arith.constant 0.000000e+00 : f32
    %13 = vector.broadcast %cst_11 : f32 to vector<8x48xf32>
    %14 = arith.maximumf %12, %13 : vector<8x48xf32>
    %c0_12 = arith.constant 0 : index
    %c0_13 = arith.constant 0 : index
    %15 = vector.load %arg6[%c0_12, %c0_13] : memref<48x128xf32, #tpu.memory_space<vmem>>, vector<48x128xf32>
    %cst_14 = arith.constant dense<0.000000e+00> : vector<8x128xf32>
    %16 = tpu.matmul %14, %15, %cst_14 {dimension_numbers = #tpu.dot_dimension_numbers<[1], [0], [0], [1], [0, 0, 1, 1], [], []>} : vector<8x48xf32>, vector<48x128xf32>, vector<8x128xf32> -> vector<8x128xf32>
    %c0_15 = arith.constant 0 : index
    %c0_16 = arith.constant 0 : index
    %17 = vector.load %arg7[%c0_15, %c0_16] : memref<1x128xf32, #tpu.memory_space<vmem>>, vector<1x128xf32>
    %18 = vector.broadcast %17 : vector<1x128xf32> to vector<8x128xf32>
    %19 = arith.addf %16, %18 : vector<8x128xf32>
    %20 = vector.extract_strided_slice %19 {offsets = [0, 0], sizes = [8, 2], strides = [1, 1]} : vector<8x128xf32> to vector<8x2xf32>
    %c0_17 = arith.constant 0 : index
    %c0_18 = arith.constant 0 : index
    %21 = vector.load %arg8[%c0_17, %c0_18] : memref<8x2xf32, #tpu.memory_space<vmem>>, vector<8x2xf32>
    tpu.vector_store %arg8[%c0_17, %c0_18], %20 {strides = array<i32>} : memref<8x2xf32, #tpu.memory_space<vmem>>, vector<8x2xf32>,
    return
  }
  func.func @transform_0(%arg0: i32) -> (i32, i32) {
    %c0_i32 = arith.constant 0 : i32
    %c0_i32_0 = arith.constant 0 : i32
    return %arg0, %c0_i32 : i32, i32
  }
  func.func @transform_1(%arg0: i32) -> (i32, i32) {
    %c0_i32 = arith.constant 0 : i32
    %c0_i32_0 = arith.constant 0 : i32
    %c0_i32_1 = arith.constant 0 : i32
    return %c0_i32, %c0_i32_0 : i32, i32
  }
  func.func @transform_2(%arg0: i32) -> (i32, i32) {
    %c0_i32 = arith.constant 0 : i32
    %c0_i32_0 = arith.constant 0 : i32
    %c0_i32_1 = arith.constant 0 : i32
    return %c0_i32, %c0_i32_0 : i32, i32
  }
  func.func @transform_3(%arg0: i32) -> (i32, i32) {
    %c0_i32 = arith.constant 0 : i32
    %c0_i32_0 = arith.constant 0 : i32
    %c0_i32_1 = arith.constant 0 : i32
    return %c0_i32, %c0_i32_0 : i32, i32
  }
  func.func @transform_4(%arg0: i32) -> (i32, i32) {
    %c0_i32 = arith.constant 0 : i32
    %c0_i32_0 = arith.constant 0 : i32
    %c0_i32_1 = arith.constant 0 : i32
    return %c0_i32, %c0_i32_0 : i32, i32
  }
  func.func @transform_5(%arg0: i32) -> (i32, i32) {
    %c0_i32 = arith.constant 0 : i32
    %c0_i32_0 = arith.constant 0 : i32
    %c0_i32_1 = arith.constant 0 : i32
    return %c0_i32, %c0_i32_0 : i32, i32
  }
  func.func @transform_6(%arg0: i32) -> (i32, i32) {
    %c0_i32 = arith.constant 0 : i32
    %c0_i32_0 = arith.constant 0 : i32
    %c0_i32_1 = arith.constant 0 : i32
    return %c0_i32, %c0_i32_0 : i32, i32
  }
  func.func @transform_7(%arg0: i32) -> (i32, i32) {
    %c0_i32 = arith.constant 0 : i32
    %c0_i32_0 = arith.constant 0 : i32
    return %arg0, %c0_i32 : i32, i32
  }
}

</mosaic_0001>

<llo_original>
// kernel: tpu_custom_call.1
$region0: #{tpu_custom_call.1}
  #allocation0 [shape = 'u32[]', space=smem, size = 0x4, offset = 0x4, fixed_abs, tag = 'smem constant byte address 0x4 - core index']
  #allocation1 [shape = 'u32[144,128]{1,0:T(1,128)}', space=vmem, size = 0x12000, scoped, tag = 'internal scratch']
  %s0 = inlined_call_operand.hbm [shape: f32[8,28], index: 0, kind: input, shape index: {}]
  %s1 = inlined_call_operand.hbm [shape: f32[28,32], index: 1, kind: input, shape index: {}]
  %s2 = inlined_call_operand.vmem [shape: f32[1,32], index: 2, kind: input, shape index: {}]
  %s3 = inlined_call_operand.hbm [shape: f32[32,48], index: 3, kind: input, shape index: {}]
  %s4 = inlined_call_operand.vmem [shape: f32[1,48], index: 4, kind: input, shape index: {}]
  %s5 = inlined_call_operand.hbm [shape: f32[48,128], index: 5, kind: input, shape index: {}]
  %s6 = inlined_call_operand.vmem [shape: f32[1,128], index: 6, kind: input, shape index: {}]
  %s7 = inlined_call_operand.vmem [shape: f32[8,2], index: 7, kind: output, shape index: {}]
  %s8 = sld [smem:[#allocation0]]
  $region54: #{tpu_custom_call.1} parent=0
    _
  %s10 = ssub.s32 1, %s8
  %s11 = scalar_select 0, %s10, %s8
  $region1: #{tpu_custom_call.1} parent=0
    #allocation2 [shape = 'u8[4096]{0}', space=vmem, size = 0x1000, scoped, tag = 'input window, operand 0, single buffered']
    #allocation3 [shape = 's32[1]{0}', space=sflag, size = 0x4, scoped, tag = 'scoped memory for tpu_custom_call.1']
    #allocation4 [shape = 'u8[16384]{0}', space=vmem, size = 0x4000, scoped, tag = 'input window, operand 1, single buffered']
    #allocation5 [shape = 's32[1]{0}', space=sflag, size = 0x4, scoped, tag = 'scoped memory for tpu_custom_call.1']
    #allocation6 [shape = 'u8[16384]{0}', space=vmem, size = 0x4000, scoped, tag = 'input window, operand 3, single buffered']
    #allocation7 [shape = 'u8[24576]{0}', space=vmem, size = 0x6000, scoped, tag = 'input window, operand 5, single buffered']
    #allocation8 [shape = 's32[1]{0}', space=sflag, size = 0x4, scoped, tag = 'scoped memory for tpu_custom_call.1']
    %12 = vsyncpa [#allocation3], 0
    %13 = vsyncpa [#allocation5], 0
    %14 = vsyncpa [#allocation8], 0
    // Predicated region
    $region2: #{tpu_custom_call.1} parent=1 // pred_check
      _
    $region3: #{tpu_custom_call.1} parent=1 // pred_check_branch
      %16 = sbr.rel (0) target = $region5
    $region4: #{tpu_custom_call.1} parent=1 // pred_region
      %s18 = ssub.s32 128, 128
      %19 = vsyncadd [#allocation3], %s18
      %s21 = sshll.u32 [#allocation2], 4
      %s22 = int_to_ptr.vmem [resolvable:$true] %s21
      %24 = dma.hbm_to_vmem [thread:$0]  %s0, 128, %s22, [#allocation3]
    $region5: #{tpu_custom_call.1} parent=1 // pred_fallthru
      _
    // Predicated region
    $region6: #{tpu_custom_call.1} parent=1 // pred_check
      _
    $region7: #{tpu_custom_call.1} parent=1 // pred_check_branch
      %26 = sbr.rel (0) target = $region9
    $region8: #{tpu_custom_call.1} parent=1 // pred_region
      %s28 = ssub.s32 512, 512
      %29 = vsyncadd [#allocation5], %s28
      %s30 = sshll.u32 [#allocation4], 4
      %s31 = int_to_ptr.vmem [resolvable:$true] %s30
      %36 = dma.hbm_to_vmem [thread:$0]  %s1, 512, %s31, [#allocation5], 128, 128, 8
    $region9: #{tpu_custom_call.1} parent=1 // pred_fallthru
      _
    // Predicated region
    $region10: #{tpu_custom_call.1} parent=1 // pred_check
      _
    $region11: #{tpu_custom_call.1} parent=1 // pred_check_branch
      %38 = sbr.rel (0) target = $region13
    $region12: #{tpu_custom_call.1} parent=1 // pred_region
      _
    $region13: #{tpu_custom_call.1} parent=1 // pred_fallthru
      _
    // Predicated region
    $region14: #{tpu_custom_call.1} parent=1 // pred_check
      _
    $region15: #{tpu_custom_call.1} parent=1 // pred_check_branch
      %40 = sbr.rel (0) target = $region17
    $region16: #{tpu_custom_call.1} parent=1 // pred_region
      %s42 = ssub.s32 512, 512
      %43 = vsyncadd [#allocation5], %s42
      %s44 = sshll.u32 [#allocation6], 4
      %s45 = int_to_ptr.vmem [resolvable:$true] %s44
      %50 = dma.hbm_to_vmem [thread:$0]  %s3, 512, %s45, [#allocation5], 128, 128, 8
    $region17: #{tpu_custom_call.1} parent=1 // pred_fallthru
      _
    // Predicated region
    $region18: #{tpu_custom_call.1} parent=1 // pred_check
      _
    $region19: #{tpu_custom_call.1} parent=1 // pred_check_branch
      %52 = sbr.rel (0) target = $region21
    $region20: #{tpu_custom_call.1} parent=1 // pred_region
      _
    $region21: #{tpu_custom_call.1} parent=1 // pred_fallthru
      _
    // Predicated region
    $region22: #{tpu_custom_call.1} parent=1 // pred_check
      _
    $region23: #{tpu_custom_call.1} parent=1 // pred_check_branch
      %54 = sbr.rel (0) target = $region25
    $region24: #{tpu_custom_call.1} parent=1 // pred_region
      %s56 = ssub.s32 768, 768
      %57 = vsyncadd [#allocation8], %s56
      %s58 = sshll.u32 [#allocation7], 4
      %s59 = int_to_ptr.vmem [resolvable:$true] %s58
      %64 = dma.hbm_to_vmem [thread:$0]  %s5, 768, %s59, [#allocation8], 128, 128, 8
    $region25: #{tpu_custom_call.1} parent=1 // pred_fallthru
      _
    // Predicated region
    $region26: #{tpu_custom_call.1} parent=1 // pred_check
      _
    $region27: #{tpu_custom_call.1} parent=1 // pred_check_branch
      %66 = sbr.rel (0) target = $region29
    $region28: #{tpu_custom_call.1} parent=1 // pred_region
      _
    $region29: #{tpu_custom_call.1} parent=1 // pred_fallthru
      _
    // Predicated region
    $region30: #{tpu_custom_call.1} parent=1 // pred_check
      _
    $region31: #{tpu_custom_call.1} parent=1 // pred_check_branch
      %68 = sbr.rel (0) target = $region33
    $region32: #{tpu_custom_call.1} parent=1 // pred_region
      %69 = dma.done [#allocation3], 128
    $region33: #{tpu_custom_call.1} parent=1 // pred_fallthru
      _
    // Predicated region
    $region34: #{tpu_custom_call.1} parent=1 // pred_check
      _
    $region35: #{tpu_custom_call.1} parent=1 // pred_check_branch
      %71 = sbr.rel (0) target = $region37
    $region36: #{tpu_custom_call.1} parent=1 // pred_region
      %72 = dma.done [#allocation5], 512
    $region37: #{tpu_custom_call.1} parent=1 // pred_fallthru
      _
    // Predicated region
    $region38: #{tpu_custom_call.1} parent=1 // pred_check
      _
    $region39: #{tpu_custom_call.1} parent=1 // pred_check_branch
      %74 = sbr.rel (0) target = $region41
    $region40: #{tpu_custom_call.1} parent=1 // pred_region
      %75 = dma.done [#allocation5], 512
    $region41: #{tpu_custom_call.1} parent=1 // pred_fallthru
      _
    // Predicated region
    $region42: #{tpu_custom_call.1} parent=1 // pred_check
      _
    $region43: #{tpu_custom_call.1} parent=1 // pred_check_branch
      %77 = sbr.rel (0) target = $region45
    $region44: #{tpu_custom_call.1} parent=1 // pred_region
      %78 = dma.done [#allocation8], 768
    $region45: #{tpu_custom_call.1} parent=1 // pred_fallthru
      _
    %v79 = vld [vmem:[#allocation2] sm:$0xff]
    %v80 = vld [vmem:[#allocation4] sm:$0xff]
    %v81 = vld [vmem:[#allocation4 + $0x8] sm:$0xff]
    %v82 = vld [vmem:[#allocation4 + $0x10] sm:$0xff]
    %v83 = vld [vmem:[#allocation4 + $0x18] sm:$0xf]
    %v84 = vld [vmem:[%s2] sm:$0x1]
    %v86 = vlaneseq
    %v87 = vshrl.u32 %v86, 7
    %v88 = vsub.s32 0, %v87
    %v89 = vrot.slane %v84, %v88
    %vm91 = vcmask 228352
    %v93 = vsel %vm91, %v79, 0
    %vm95 = vcmask 1043456
    %v97 = vsel %vm95, %v83, 0
    %99 = vmatprep.subr.mxu0 0.0
    %100 = vmatpush1.msra.mxu0 %v80
    %101 = vmatprep.subr.mxu0 0.0
    %102 = vmatpush1.msra.mxu0 %v81
    %103 = vmatprep.subr.mxu0 0.0
    %104 = vmatpush1.msra.mxu0 %v82
    %105 = vmatprep.subr.mxu0 0.0
    %106 = vmatpush1.msra.mxu0 %v97
    %107 = vmatprep.subr.mxu0 0.0
    %108 = vmatpush1.msra.mxu0 0.0
    %109 = vmatprep.subr.mxu0 0.0
    %110 = vmatpush1.msra.mxu0 0.0
    %111 = vmatprep.subr.mxu0 0.0
    %112 = vmatpush1.msra.mxu0 0.0
    %113 = vmatprep.subr.mxu0 0.0
    %114 = vmatpush1.msra.mxu0 0.0
    %115 = vmatprep.subr.mxu0 0.0
    %116 = vmatpush1.msra.mxu0 0.0
    %117 = vmatprep.subr.mxu0 0.0
    %118 = vmatpush1.msra.mxu0 0.0
    %119 = vmatprep.subr.mxu0 0.0
    %120 = vmatpush1.msra.mxu0 0.0
    %121 = vmatprep.subr.mxu0 0.0
    %122 = vmatpush1.msra.mxu0 0.0
    %123 = vmatprep.subr.mxu0 0.0
    %124 = vmatpush1.msra.mxu0 0.0
    %125 = vmatprep.subr.mxu0 0.0
    %126 = vmatpush1.msra.mxu0 0.0
    %127 = vmatprep.subr.mxu0 0.0
    %128 = vmatpush1.msra.mxu0 0.0
    %129 = vmatprep.subr.mxu0 0.0
    %130 = vmatpush1.msra.mxu0 0.0
    %131 = vmatprep.subr.mxu0 0.0
    %132 = vmatpush1.msra.mxu0 0.0
    %133 = vmatprep.subr.mxu0 0.0
    %134 = vmatpush1.msra.mxu0 0.0
    %135 = vmatprep.subr.mxu0 0.0
    %136 = vmatpush1.msra.mxu0 0.0
    %137 = vmatprep.subr.mxu0 0.0
    %138 = vmatpush1.msra.mxu0 0.0
    %139 = vmatprep.subr.mxu0 0.0
    %140 = vmatpush1.msra.mxu0 0.0
    %141 = vmatprep.subr.mxu0 0.0
    %142 = vmatpush1.msra.mxu0 0.0
    %143 = vmatprep.subr.mxu0 0.0
    %144 = vmatpush1.msra.mxu0 0.0
    %145 = vmatprep.subr.mxu0 0.0
    %146 = vmatpush1.msra.mxu0 0.0
    %147 = vmatprep.subr.mxu0 0.0
    %148 = vmatpush1.msra.mxu0 0.0
    %149 = vmatprep.subr.mxu0 0.0
    %150 = vmatpush1.msra.mxu0 0.0
    %151 = vmatprep.subr.mxu0 0.0
    %152 = vmatpush1.msra.mxu0 0.0
    %153 = vmatprep.subr.mxu0 0.0
    %154 = vmatpush1.msra.mxu0 0.0
    %155 = vmatprep.subr.mxu0 0.0
    %156 = vmatpush1.msra.mxu0 0.0
    %157 = vmatprep.subr.mxu0 0.0
    %158 = vmatpush1.msra.mxu0 0.0
    %159 = vmatprep.subr.mxu0 0.0
    %160 = vmatpush1.msra.mxu0 0.0
    %161 = vmatprep.subr.mxu0 0.0
    %162 = vmatpush1.msra.mxu0 0.0
    %163 = vmatprep.mubr.f32.mxu0 0.0
    %164 = vmatmul.mubr.f32.gmra.mrb[0].mxu0 %v93
    %v165 = vpop.f32.mrb[0].mxu0
    %v166 = vadd.f32 %v89, %v165
    %v167 = vpop.f32.mrb[0].mxu0
    %168 = vdwg.mxu0
    %v169 = vmax.f32 %v166, 0.0
    %v170 = vld [vmem:[#allocation6] sm:$0xff]
    %v171 = vld [vmem:[#allocation6 + $0x8] sm:$0xff]
    %v172 = vld [vmem:[#allocation6 + $0x10] sm:$0xff]
    %v173 = vld [vmem:[#allocation6 + $0x18] sm:$0xff]
    %v174 = vld [vmem:[%s4] sm:$0x1]
    %v176 = vlaneseq
    %v177 = vshrl.u32 %v176, 7
    %v178 = vsub.s32 0, %v177
    %v179 = vrot.slane %v174, %v178
    %vm181 = vcmask 261120
    %v183 = vsel %vm181, %v169, 0
    %185 = vmatprep.subr.mxu0 0.0
    %186 = vmatpush1.msra.mxu0 %v170
    %187 = vmatprep.subr.mxu0 0.0
    %188 = vmatpush1.msra.mxu0 %v171
    %189 = vmatprep.subr.mxu0 0.0
    %190 = vmatpush1.msra.mxu0 %v172
    %191 = vmatprep.subr.mxu0 0.0
    %192 = vmatpush1.msra.mxu0 %v173
    %193 = vmatprep.subr.mxu0 0.0
    %194 = vmatpush1.msra.mxu0 0.0
    %195 = vmatprep.subr.mxu0 0.0
    %196 = vmatpush1.msra.mxu0 0.0
    %197 = vmatprep.subr.mxu0 0.0
    %198 = vmatpush1.msra.mxu0 0.0
    %199 = vmatprep.subr.mxu0 0.0
    %200 = vmatpush1.msra.mxu0 0.0
    %201 = vmatprep.subr.mxu0 0.0
    %202 = vmatpush1.msra.mxu0 0.0
    %203 = vmatprep.subr.mxu0 0.0
    %204 = vmatpush1.msra.mxu0 0.0
    %205 = vmatprep.subr.mxu0 0.0
    %206 = vmatpush1.msra.mxu0 0.0
    %207 = vmatprep.subr.mxu0 0.0
    %208 = vmatpush1.msra.mxu0 0.0
    %209 = vmatprep.subr.mxu0 0.0
    %210 = vmatpush1.msra.mxu0 0.0
    %211 = vmatprep.subr.mxu0 0.0
    %212 = vmatpush1.msra.mxu0 0.0
    %213 = vmatprep.subr.mxu0 0.0
    %214 = vmatpush1.msra.mxu0 0.0
    %215 = vmatprep.subr.mxu0 0.0
    %216 = vmatpush1.msra.mxu0 0.0
    %217 = vmatprep.subr.mxu0 0.0
    %218 = vmatpush1.msra.mxu0 0.0
    %219 = vmatprep.subr.mxu0 0.0
    %220 = vmatpush1.msra.mxu0 0.0
    %221 = vmatprep.subr.mxu0 0.0
    %222 = vmatpush1.msra.mxu0 0.0
    %223 = vmatprep.subr.mxu0 0.0
    %224 = vmatpush1.msra.mxu0 0.0
    %225 = vmatprep.subr.mxu0 0.0
    %226 = vmatpush1.msra.mxu0 0.0
    %227 = vmatprep.subr.mxu0 0.0
    %228 = vmatpush1.msra.mxu0 0.0
    %229 = vmatprep.subr.mxu0 0.0
    %230 = vmatpush1.msra.mxu0 0.0
    %231 = vmatprep.subr.mxu0 0.0
    %232 = vmatpush1.msra.mxu0 0.0
    %233 = vmatprep.subr.mxu0 0.0
    %234 = vmatpush1.msra.mxu0 0.0
    %235 = vmatprep.subr.mxu0 0.0
    %236 = vmatpush1.msra.mxu0 0.0
    %237 = vmatprep.subr.mxu0 0.0
    %238 = vmatpush1.msra.mxu0 0.0
    %239 = vmatprep.subr.mxu0 0.0
    %240 = vmatpush1.msra.mxu0 0.0
    %241 = vmatprep.subr.mxu0 0.0
    %242 = vmatpush1.msra.mxu0 0.0
    %243 = vmatprep.subr.mxu0 0.0
    %244 = vmatpush1.msra.mxu0 0.0
    %245 = vmatprep.subr.mxu0 0.0
    %246 = vmatpush1.msra.mxu0 0.0
    %247 = vmatprep.subr.mxu0 0.0
    %248 = vmatpush1.msra.mxu0 0.0
    %249 = vmatprep.mubr.f32.mxu0 0.0
    %250 = vmatmul.mubr.f32.gmra.mrb[0].mxu0 %v183
    %v251 = vpop.f32.mrb[0].mxu0
    %v252 = vadd.f32 %v179, %v251
    %v253 = vpop.f32.mrb[0].mxu0
    %254 = vdwg.mxu0
    %v255 = vmax.f32 %v252, 0.0
    %v256 = vld [vmem:[#allocation7] sm:$0xff]
    %v257 = vld [vmem:[#allocation7 + $0x8] sm:$0xff]
    %v258 = vld [vmem:[#allocation7 + $0x10] sm:$0xff]
    %v259 = vld [vmem:[#allocation7 + $0x18] sm:$0xff]
    %v260 = vld [vmem:[#allocation7 + $0x20] sm:$0xff]
    %v261 = vld [vmem:[#allocation7 + $0x28] sm:$0xff]
    %v262 = vld [vmem:[%s6] sm:$0x1]
    %v264 = vlaneseq
    %v265 = vshrl.u32 %v264, 7
    %v266 = vsub.s32 0, %v265
    %v267 = vrot.slane %v262, %v266
    %vm269 = vcmask 392192
    %v271 = vsel %vm269, %v255, 0
    %273 = vmatprep.subr.mxu0 0.0
    %274 = vmatpush1.msra.mxu0 %v256
    %275 = vmatprep.subr.mxu0 0.0
    %276 = vmatpush1.msra.mxu0 %v257
    %277 = vmatprep.subr.mxu0 0.0
    %278 = vmatpush1.msra.mxu0 %v258
    %279 = vmatprep.subr.mxu0 0.0
    %280 = vmatpush1.msra.mxu0 %v259
    %281 = vmatprep.subr.mxu0 0.0
    %282 = vmatpush1.msra.mxu0 %v260
    %283 = vmatprep.subr.mxu0 0.0
    %284 = vmatpush1.msra.mxu0 %v261
    %285 = vmatprep.subr.mxu0 0.0
    %286 = vmatpush1.msra.mxu0 0.0
    %287 = vmatprep.subr.mxu0 0.0
    %288 = vmatpush1.msra.mxu0 0.0
    %289 = vmatprep.subr.mxu0 0.0
    %290 = vmatpush1.msra.mxu0 0.0
    %291 = vmatprep.subr.mxu0 0.0
    %292 = vmatpush1.msra.mxu0 0.0
    %293 = vmatprep.subr.mxu0 0.0
    %294 = vmatpush1.msra.mxu0 0.0
    %295 = vmatprep.subr.mxu0 0.0
    %296 = vmatpush1.msra.mxu0 0.0
    %297 = vmatprep.subr.mxu0 0.0
    %298 = vmatpush1.msra.mxu0 0.0
    %299 = vmatprep.subr.mxu0 0.0
    %300 = vmatpush1.msra.mxu0 0.0
    %301 = vmatprep.subr.mxu0 0.0
    %302 = vmatpush1.msra.mxu0 0.0
    %303 = vmatprep.subr.mxu0 0.0
    %304 = vmatpush1.msra.mxu0 0.0
    %305 = vmatprep.subr.mxu0 0.0
    %306 = vmatpush1.msra.mxu0 0.0
    %307 = vmatprep.subr.mxu0 0.0
    %308 = vmatpush1.msra.mxu0 0.0
    %309 = vmatprep.subr.mxu0 0.0
    %310 = vmatpush1.msra.mxu0 0.0
    %311 = vmatprep.subr.mxu0 0.0
    %312 = vmatpush1.msra.mxu0 0.0
    %313 = vmatprep.subr.mxu0 0.0
    %314 = vmatpush1.msra.mxu0 0.0
    %315 = vmatprep.subr.mxu0 0.0
    %316 = vmatpush1.msra.mxu0 0.0
    %317 = vmatprep.subr.mxu0 0.0
    %318 = vmatpush1.msra.mxu0 0.0
    %319 = vmatprep.subr.mxu0 0.0
    %320 = vmatpush1.msra.mxu0 0.0
    %321 = vmatprep.subr.mxu0 0.0
    %322 = vmatpush1.msra.mxu0 0.0
    %323 = vmatprep.subr.mxu0 0.0
    %324 = vmatpush1.msra.mxu0 0.0
    %325 = vmatprep.subr.mxu0 0.0
    %326 = vmatpush1.msra.mxu0 0.0
    %327 = vmatprep.subr.mxu0 0.0
    %328 = vmatpush1.msra.mxu0 0.0
    %329 = vmatprep.subr.mxu0 0.0
    %330 = vmatpush1.msra.mxu0 0.0
    %331 = vmatprep.subr.mxu0 0.0
    %332 = vmatpush1.msra.mxu0 0.0
    %333 = vmatprep.subr.mxu0 0.0
    %334 = vmatpush1.msra.mxu0 0.0
    %335 = vmatprep.subr.mxu0 0.0
    %336 = vmatpush1.msra.mxu0 0.0
    %337 = vmatprep.mubr.f32.mxu0 0.0
    %338 = vmatmul.mubr.f32.gmra.mrb[0].mxu0 %v271
    %v339 = vpop.f32.mrb[0].mxu0
    %v340 = vadd.f32 %v267, %v339
    %v341 = vpop.f32.mrb[0].mxu0
    %342 = vdwg.mxu0
    %vm343 = vcmask 15360
    %344 = vst.msk [vmem:[%s7] sm:$0xff] %vm343, %v340
    // Predicated region
    $region46: #{tpu_custom_call.1} parent=1 // pred_check
      _
    $region47: #{tpu_custom_call.1} parent=1 // pred_check_branch
      %346 = sbr.rel (0) target = $region49
    $region48: #{tpu_custom_call.1} parent=1 // pred_region
      _
    $region49: #{tpu_custom_call.1} parent=1 // pred_fallthru
      _
    // Predicated region
    $region50: #{tpu_custom_call.1} parent=1 // pred_check
      _
    $region51: #{tpu_custom_call.1} parent=1 // pred_check_branch
      %348 = sbr.rel (0) target = $region53
    $region52: #{tpu_custom_call.1} parent=1 // pred_region
      _
    $region53: #{tpu_custom_call.1} parent=1 // pred_fallthru
      _
    %349 = vsyncpa [#allocation3], 1
    %350 = vsyncpa [#allocation5], 1
    %351 = vsyncpa [#allocation8], 1

</llo_original>
